<compile_context>
chip_gen: v7x
topology: tpu7x:2x2x1
jax: 0.10.0
libtpu: 0.0.40
codegen_flags: <defaults>
</compile_context>

<pallas_src>
import functools

import jax
import jax.numpy as jnp
from jax import lax
from jax.experimental import pallas as pl
from jax.experimental.pallas import tpu as pltpu

KH = KW = 3   # depthwise kernel size (module default kernel_size=3)
PAD = 1       # SAME padding for k=3, stride=1, dilation=1


def _sepconv_kernel(xw_ref, m_ref, o_ref):
    """Fused depthwise-3x3 + pointwise-1x1 for one (batch, H-tile) block.

    xw_ref: (1, 1, tile_h + 2, (W+2)*C)  halo'd, W*C-folded input window
    m_ref : (KH, (W+2)*C, W*Cout)        per-kh fused (depthwise x pointwise) weights
    o_ref : (1, tile_h, W*Cout)          lane-dense output block
    """
    tile_h = o_ref.shape[1]
    x = xw_ref[0, 0]                                    # (tile_h+2, (W+2)*C), native dtype
    acc = jnp.zeros(o_ref.shape[1:], jnp.float32)
    for kh in range(KH):
        # Only 3 row (sublane) slices; kw shifts + channel mixing live in m_ref.
        xk = x[kh:kh + tile_h, :].astype(m_ref.dtype)   # per-slice cast, no eager upcast
        acc = acc + jnp.dot(xk, m_ref[kh], preferred_element_type=jnp.float32)
    o_ref[0] = acc.astype(o_ref.dtype)


@functools.partial(jax.jit, static_argnames=("tile_h",))
def separable_conv2d(x_nchw, w_dw, w_pw, *, tile_h=8):
    """x_nchw: (N,C,H,W); w_dw: (C,1,KH,KW); w_pw: (Cout,C,1,1). Returns (N,Cout,H,W)."""
    N, C, H, W = x_nchw.shape
    Cout = w_pw.shape[0]
    if H % tile_h != 0:
        tile_h = H                        # fallback: a single H tile
    n_h = H // tile_h
    t_hp = tile_h + 2                     # tile rows incl. 1-row halo on each side
    Wp = W + 2 * PAD
    L = Wp * C                            # folded input lane width
    Lo = W * Cout                         # folded (lane-dense) output width

    # bf16 MXU feed when activations are bf16 (v6e/v7x); f32 otherwise (v5e / accuracy).
    mxu_dtype = jnp.bfloat16 if x_nchw.dtype == jnp.bfloat16 else jnp.float32

    # --- glue (fused by XLA under this jit): NHWC, SAME pad, W*C fold, halo windows.
    xh = jnp.transpose(x_nchw, (0, 2, 3, 1))                        # (N,H,W,C)
    xp = jnp.pad(xh, ((0, 0), (PAD, PAD), (PAD, PAD), (0, 0)))      # (N,H+2,Wp,C)
    xf = xp.reshape(N, H + 2 * PAD, L)                              # free trailing-dim merge
    xw = jnp.stack(
        [xf[:, i * tile_h:i * tile_h + t_hp] for i in range(n_h)], axis=1
    )                                                               # (N, n_h, t_hp, L)

    # --- fused structured weights:
    #   M[kh, wp*C + c, w*Cout + co] = [wp == w + kw] * w_dw[c,0,kh,kw] * w_pw[co,c,0,0]
    dw = w_dw[:, 0, :, :].astype(jnp.float32)                       # (C, KH, KW)
    pw = w_pw[:, :, 0, 0].astype(jnp.float32)                       # (Cout, C)
    shift = jnp.stack(
        [jnp.eye(Wp, W, k=-kw, dtype=jnp.float32) for kw in range(KW)], axis=0
    )                                                               # (KW, Wp, W)
    m = jnp.einsum('kpw,chk,oc->hpcwo', shift, dw, pw)              # (KH, Wp, C, W, Cout)
    m = m.reshape(KH, L, Lo).astype(mxu_dtype)

    # --- explicit VMEM budget (double buffers + in-kernel temporaries), v7x-safe.
    x_isz = x_nchw.dtype.itemsize
    m_isz = jnp.dtype(mxu_dtype).itemsize
    step_bytes = (2 * t_hp * L * x_isz            # pipelined input window
                  + 2 * KH * L * Lo * m_isz       # fused weights
                  + 2 * tile_h * Lo * x_isz       # pipelined output
                  + KH * t_hp * L * m_isz         # sliced/cast temporaries
                  + tile_h * Lo * 4)              # f32 accumulator
    vmem_limit = int(min(64 * 2**20, max(8 * 2**20, 4 * step_bytes)))

    out_flat = pl.pallas_call(
        _sepconv_kernel,
        out_shape=jax.ShapeDtypeStruct((N, H, Lo), x_nchw.dtype),
        grid_spec=pltpu.PrefetchScalarGridSpec(
            num_scalar_prefetch=0,
            grid=(N, n_h),
            in_specs=[
                pl.BlockSpec((1, 1, t_hp, L), lambda n, h: (n, h, 0, 0)),
                pl.BlockSpec((KH, L, Lo), lambda n, h: (0, 0, 0)),
            ],
            out_specs=pl.BlockSpec((1, tile_h, Lo), lambda n, h: (n, h, 0)),
        ),
        compiler_params=pltpu.CompilerParams(
            dimension_semantics=("parallel", "parallel"),
            vmem_limit_bytes=vmem_limit,
        ),
    )(xw, m)

    # (N, H, W*Cout) -> (N, Cout, H, W); fused with the rest of the glue under jit.
    return jnp.transpose(out_flat.reshape(N, H, W, Cout), (0, 3, 1, 2))


def separable_conv2d_ref(x, w_dw, w_pw):
    """Pure-JAX reference (lax convs), NCHW semantics identical to PyTorch."""
    C = x.shape[1]
    dn = ('NCHW', 'OIHW', 'NCHW')
    y = lax.conv_general_dilated(x, w_dw, window_strides=(1, 1),
                                 padding='SAME', dimension_numbers=dn,
                                 feature_group_count=C)
    y = lax.conv_general_dilated(y, w_pw, window_strides=(1, 1),
                                 padding='VALID', dimension_numbers=dn)
    return y


if __name__ == "__main__":
    N, Cin, Cout, H, W = 2, 4, 8, 16, 16

    key = jax.random.PRNGKey(0)
    kx, kdw, kpw = jax.random.split(key, 3)
    x = jax.random.normal(kx, (N, Cin, H, W), dtype=jnp.float32)
    # Deterministic parameter init (shapes from the module's __init__):
    w_dw = jax.random.normal(kdw, (Cin, 1, KH, KW), dtype=jnp.float32) * 0.1
    w_pw = jax.random.normal(kpw, (Cout, Cin, 1, 1), dtype=jnp.float32) * 0.1
    # (bias=False by default -> no bias terms)

    out = jax.block_until_ready(separable_conv2d(x, w_dw, w_pw))
    ref = jax.block_until_ready(separable_conv2d_ref(x, w_dw, w_pw))

    assert out.shape == (N, Cout, H, W), out.shape
    assert jnp.allclose(out, ref, atol=1e-5, rtol=1e-5), \
        f"max err {jnp.max(jnp.abs(out - ref))}"
    print("KERNEL_OK")
</pallas_src>

<mosaic_0001>
module attributes {stable_mosaic.version = 11 : i64} {
  func.func @_sepconv_kernel(%arg0: i32, %arg1: i32, %arg2: memref<1x1x10x72xf32, #tpu.memory_space<vmem>>, %arg3: memref<3x72x128xf32, #tpu.memory_space<vmem>>, %arg4: memref<1x8x128xf32, #tpu.memory_space<vmem>>) attributes {dimension_semantics = [#tpu.dimension_semantics<parallel>, #tpu.dimension_semantics<parallel>], iteration_bounds = array<i64: 2, 2>, scalar_prefetch = 0 : i64, scratch_operands = 0 : i64, tpu.core_type = #tpu.core_type<tc>, window_params = [{transform_indices = @transform_0, window_bounds = array<i64: 1, 1, 10, 72>}, {pipeline_mode = #tpu.pipeline_mode<synchronous>, transform_indices = @transform_1, window_bounds = array<i64: 3, 72, 128>}, {transform_indices = @transform_2, window_bounds = array<i64: 1, 8, 128>}]} {
    %c0 = arith.constant 0 : index
    %c0_0 = arith.constant 0 : index
    %c0_1 = arith.constant 0 : index
    %c0_2 = arith.constant 0 : index
    %0 = vector.load %arg2[%c0, %c0_0, %c0_1, %c0_2] : memref<1x1x10x72xf32, #tpu.memory_space<vmem>>, vector<1x1x10x72xf32>
    %1 = vector.shape_cast %0 : vector<1x1x10x72xf32> to vector<10x72xf32>
    %cst = arith.constant 0.000000e+00 : f32
    %2 = vector.broadcast %cst : f32 to vector<8x128xf32>
    %3 = vector.extract_strided_slice %1 {offsets = [0, 0], sizes = [8, 72], strides = [1, 1]} : vector<10x72xf32> to vector<8x72xf32>
    %c0_3 = arith.constant 0 : index
    %c0_4 = arith.constant 0 : index
    %c0_5 = arith.constant 0 : index
    %4 = vector.load %arg3[%c0_3, %c0_4, %c0_5] : memref<3x72x128xf32, #tpu.memory_space<vmem>>, vector<1x72x128xf32>
    %5 = vector.shape_cast %4 : vector<1x72x128xf32> to vector<72x128xf32>
    %cst_6 = arith.constant dense<0.000000e+00> : vector<8x128xf32>
    %6 = tpu.matmul %3, %5, %cst_6 {dimension_numbers = #tpu.dot_dimension_numbers<[1], [0], [0], [1], [0, 0, 1, 1], [], []>} : vector<8x72xf32>, vector<72x128xf32>, vector<8x128xf32> -> vector<8x128xf32>
    %7 = arith.addf %2, %6 : vector<8x128xf32>
    %8 = vector.extract_strided_slice %1 {offsets = [1, 0], sizes = [8, 72], strides = [1, 1]} : vector<10x72xf32> to vector<8x72xf32>
    %c1 = arith.constant 1 : index
    %c0_7 = arith.constant 0 : index
    %c0_8 = arith.constant 0 : index
    %9 = vector.load %arg3[%c1, %c0_7, %c0_8] : memref<3x72x128xf32, #tpu.memory_space<vmem>>, vector<1x72x128xf32>
    %10 = vector.shape_cast %9 : vector<1x72x128xf32> to vector<72x128xf32>
    %cst_9 = arith.constant dense<0.000000e+00> : vector<8x128xf32>
    %11 = tpu.matmul %8, %10, %cst_9 {dimension_numbers = #tpu.dot_dimension_numbers<[1], [0], [0], [1], [0, 0, 1, 1], [], []>} : vector<8x72xf32>, vector<72x128xf32>, vector<8x128xf32> -> vector<8x128xf32>
    %12 = arith.addf %7, %11 : vector<8x128xf32>
    %13 = vector.extract_strided_slice %1 {offsets = [2, 0], sizes = [8, 72], strides = [1, 1]} : vector<10x72xf32> to vector<8x72xf32>
    %c2 = arith.constant 2 : index
    %c0_10 = arith.constant 0 : index
    %c0_11 = arith.constant 0 : index
    %14 = vector.load %arg3[%c2, %c0_10, %c0_11] : memref<3x72x128xf32, #tpu.memory_space<vmem>>, vector<1x72x128xf32>
    %15 = vector.shape_cast %14 : vector<1x72x128xf32> to vector<72x128xf32>
    %cst_12 = arith.constant dense<0.000000e+00> : vector<8x128xf32>
    %16 = tpu.matmul %13, %15, %cst_12 {dimension_numbers = #tpu.dot_dimension_numbers<[1], [0], [0], [1], [0, 0, 1, 1], [], []>} : vector<8x72xf32>, vector<72x128xf32>, vector<8x128xf32> -> vector<8x128xf32>
    %17 = arith.addf %12, %16 : vector<8x128xf32>
    %c0_13 = arith.constant 0 : index
    %c0_14 = arith.constant 0 : index
    %c0_15 = arith.constant 0 : index
    %18 = vector.load %arg4[%c0_13, %c0_14, %c0_15] : memref<1x8x128xf32, #tpu.memory_space<vmem>>, vector<1x8x128xf32>
    %19 = vector.shape_cast %18 : vector<1x8x128xf32> to vector<8x128xf32>
    %20 = vector.shape_cast %17 : vector<8x128xf32> to vector<1x8x128xf32>
    tpu.vector_store %arg4[%c0_13, %c0_14, %c0_15], %20 {strides = array<i32>} : memref<1x8x128xf32, #tpu.memory_space<vmem>>, vector<1x8x128xf32>,
    return
  }
  func.func @transform_0(%arg0: i32, %arg1: i32) -> (i32, i32, i32, i32) {
    %c0_i32 = arith.constant 0 : i32
    %c0_i32_0 = arith.constant 0 : i32
    %c0_i32_1 = arith.constant 0 : i32
    return %arg0, %arg1, %c0_i32, %c0_i32_0 : i32, i32, i32, i32
  }
  func.func @transform_1(%arg0: i32, %arg1: i32) -> (i32, i32, i32) {
    %c0_i32 = arith.constant 0 : i32
    %c0_i32_0 = arith.constant 0 : i32
    %c0_i32_1 = arith.constant 0 : i32
    %c0_i32_2 = arith.constant 0 : i32
    return %c0_i32, %c0_i32_0, %c0_i32_1 : i32, i32, i32
  }
  func.func @transform_2(%arg0: i32, %arg1: i32) -> (i32, i32, i32) {
    %c0_i32 = arith.constant 0 : i32
    %c0_i32_0 = arith.constant 0 : i32
    return %arg0, %arg1, %c0_i32 : i32, i32, i32
  }
}

</mosaic_0001>

<llo_original>
// kernel: separable_conv2d.1
$region0: #{separable_conv2d.1}
  #allocation0 [shape = 'u32[]', space=smem, size = 0x4, offset = 0x4, fixed_abs, tag = 'smem constant byte address 0x4 - core index']
  #allocation1 [shape = 'u32[144,128]{1,0:T(1,128)}', space=vmem, size = 0x12000, scoped, tag = 'internal scratch']
  %s0 = inlined_call_operand.vmem [shape: f32[2,2,10,72], index: 0, kind: input, shape index: {}]
  %s1 = inlined_call_operand.vmem [shape: f32[3,72,128], index: 1, kind: input, shape index: {}]
  %s2 = inlined_call_operand.vmem [shape: f32[2,16,128], index: 2, kind: output, shape index: {}]
  %s3 = sld [smem:[#allocation0]]
  $region41: #{separable_conv2d.1} parent=0
    _
  %s5 = ssub.s32 1, %s3
  %s6 = scalar_select 0, %s5, %s3
  loop: start=0, step=1, limit=6
  $region2: #{separable_conv2d.1} parent=0 // loop_pre_header
    _
  $region3: #{separable_conv2d.1} parent=0 // loop_header
    %s8 = sphi 0, %s12
    %p9 = scmp.ge.s32.totalorder %s8, 6
    %s15 = sphi 0, %s27
    %s16 = sphi 0, %s23
    %s17 = sphi 0, %s15
    %s18 = sphi 0, %s16
    %s19 = sphi 0, %s17
    %s20 = sphi 0, %s18
    %s32 = sphi 0, %s34
    %s35 = sphi 0, %s32
    %s36 = sphi 0, %s35
    %s52 = sphi 0, %s36
    %s56 = sphi 0, %s56
    %s58 = sphi 0, %s56
    %s59 = sphi 0, %s58
    %s73 = sphi 0, %s59
    %s81 = sphi 0, %s83
    %s84 = sphi 0, %s81
    %s85 = sphi 0, %s84
    %s101 = sphi 0, %s85
  $region4: #{separable_conv2d.1} parent=0 // loop_header_branch
    %11 = sbr.rel (%p9) target = $region8
  $region5: #{separable_conv2d.1} parent=0 // loop_body
    %s13 = ssub.s32 %s8, 1
    %s14 = ssub.s32 %s8, 2
    %s21 = sadd.s32 1, %s16
    %p22 = scmp.ge.s32.totalorder %s21, 2
    %s23 = scalar_select %p22, 0, %s21
    %s24 = sadd.s32 1, %s15
    %s25 = scalar_select %p22, %s24, %s15
    %p26 = scmp.ge.s32.totalorder %s25, 2
    %s27 = scalar_select %p26, 0, %s25
    %s28 = ssub.s32 %s15, %s27
    %s29 = ssub.s32 %s16, %s23
    %s30 = sor.u32 %s28, %s29
    %p31 = scmp.eq.s32.totalorder %s30, 0
    %s33 = sadd.s32 %s32, 1
    %s34 = scalar_select %p31, %s32, %s33
    %p37 = pneg %p31
    %p38 = scmp.eq.s32.totalorder %s8, 3
    %p39 = por %p37, %p38
    %p40 = scmp.ne.s32.totalorder %s32, %s35
    %p41 = scmp.eq.s32.totalorder %s8, 0
    %p42 = por %p40, %p41
    %p43 = scmp.ne.s32.totalorder %s32, %s35
    %p44 = scmp.eq.s32.totalorder %s13, 3
    %p45 = por %p43, %p44
    %p46 = scmp.ne.s32.totalorder %s35, %s36
    %p47 = scmp.eq.s32.totalorder %s13, 0
    %p48 = por %p46, %p47
    %p49 = scmp.ne.s32.totalorder %s35, %s36
    %p50 = scmp.eq.s32.totalorder %s14, 3
    %p51 = por %p49, %p50
    %p53 = scmp.ne.s32.totalorder %s36, %s52
    %p54 = scmp.eq.s32.totalorder %s14, 0
    %p55 = por %p53, %p54
    %s57 = sadd.s32 %s56, 1
    %p60 = scmp.eq.s32.totalorder %s8, 3
    %p61 = scmp.ne.s32.totalorder %s56, %s58
    %p62 = scmp.eq.s32.totalorder %s8, 0
    %p63 = por %p61, %p62
    %p64 = scmp.ne.s32.totalorder %s56, %s58
    %p65 = scmp.eq.s32.totalorder %s13, 3
    %p66 = por %p64, %p65
    %p67 = scmp.ne.s32.totalorder %s58, %s59
    %p68 = scmp.eq.s32.totalorder %s13, 0
    %p69 = por %p67, %p68
    %p70 = scmp.ne.s32.totalorder %s58, %s59
    %p71 = scmp.eq.s32.totalorder %s14, 3
    %p72 = por %p70, %p71
    %p74 = scmp.ne.s32.totalorder %s59, %s73
    %p75 = scmp.eq.s32.totalorder %s14, 0
    %p76 = por %p74, %p75
    %s77 = ssub.s32 %s15, %s27
    %s78 = ssub.s32 %s16, %s23
    %s79 = sor.u32 %s77, %s78
    %p80 = scmp.eq.s32.totalorder %s79, 0
    %s82 = sadd.s32 %s81, 1
    %s83 = scalar_select %p80, %s81, %s82
    %p86 = pneg %p80
    %p87 = scmp.eq.s32.totalorder %s8, 3
    %p88 = por %p86, %p87
    %p89 = scmp.ne.s32.totalorder %s81, %s84
    %p90 = scmp.eq.s32.totalorder %s8, 0
    %p91 = por %p89, %p90
    %p92 = scmp.ne.s32.totalorder %s81, %s84
    %p93 = scmp.eq.s32.totalorder %s13, 3
    %p94 = por %p92, %p93
    %p95 = scmp.ne.s32.totalorder %s84, %s85
    %p96 = scmp.eq.s32.totalorder %s13, 0
    %p97 = por %p95, %p96
    %p98 = scmp.ne.s32.totalorder %s84, %s85
    %p99 = scmp.eq.s32.totalorder %s14, 3
    %p100 = por %p98, %p99
    %p102 = scmp.ne.s32.totalorder %s85, %s101
    %p103 = scmp.eq.s32.totalorder %s14, 0
    %p104 = por %p102, %p103
    %p105 = scmp.le.s32.totalorder 1, %s8
    %p106 = scmp.lt.s32.totalorder %s8, 5
    %p107 = pnand %p105, %p106
    %p108 = pneg %p107
    // Predicated region
    $region9: #{separable_conv2d.1} parent=5 // pred_check
      _
    $region10: #{separable_conv2d.1} parent=5 // pred_check_branch
      %110 = sbr.rel (%p107) target = $region12
    $region11: #{separable_conv2d.1} parent=5 // pred_region
      %s111 = ssub.s32 %s8, 1
      // Predicated region
      $region13: #{separable_conv2d.1} parent=11 // pred_check
        %p112 = pneg %p69
      $region14: #{separable_conv2d.1} parent=11 // pred_check_branch
        %114 = sbr.rel (%p112) target = $region16
      $region15: #{separable_conv2d.1} parent=11 // pred_region
        _
      $region16: #{separable_conv2d.1} parent=11 // pred_fallthru
        _
    $region12: #{separable_conv2d.1} parent=5 // pred_fallthru
      _
    %p115 = scmp.lt.s32.totalorder %s8, 4
    // Predicated region
    $region17: #{separable_conv2d.1} parent=5 // pred_check
      %p116 = pneg %p115
    $region18: #{separable_conv2d.1} parent=5 // pred_check_branch
      %118 = sbr.rel (%p116) target = $region20
    $region19: #{separable_conv2d.1} parent=5 // pred_region
      // Predicated region
      $region21: #{separable_conv2d.1} parent=19 // pred_check
        %p119 = pneg %p42
      $region22: #{separable_conv2d.1} parent=19 // pred_check_branch
        %121 = sbr.rel (%p119) target = $region24
      $region23: #{separable_conv2d.1} parent=19 // pred_region
        %p122 = scmp.lt.s32.totalorder %s15, 1
        %s123 = scalar_select %p122, %s15, 1
        %p124 = scmp.lt.s32.totalorder %s16, 1
        %s125 = scalar_select %p124, %s16, 1
        %s126 = smul.addr %s125, 2
        %s127 = smul.addr %s123, 4
        %s128 = sadd.s32 %s126, %s127
        %s129 = smul.addr %s128, 8
        %s130 = scalar_lea.vmem %s0, %s129
      $region24: #{separable_conv2d.1} parent=19 // pred_fallthru
        _
    $region20: #{separable_conv2d.1} parent=5 // pred_fallthru
      _
    %p131 = scmp.le.s32.totalorder 1, %s8
    %p132 = scmp.lt.s32.totalorder %s8, 5
    %p133 = pnand %p131, %p132
    %p134 = pneg %p133
    // Predicated region
    $region25: #{separable_conv2d.1} parent=5 // pred_check
      _
    $region26: #{separable_conv2d.1} parent=5 // pred_check_branch
      %136 = sbr.rel (%p133) target = $region28
    $region27: #{separable_conv2d.1} parent=5 // pred_region
      %s137 = ssub.s32 %s8, 1
      %p138 = scmp.lt.s32.totalorder %s17, 1
      %s139 = scalar_select %p138, %s17, 1
      %p140 = scmp.lt.s32.totalorder %s18, 1
      %s141 = scalar_select %p140, %s18, 1
      %s142 = smul.addr %s141, 2
      %s143 = smul.addr %s139, 4
      %s144 = sadd.s32 %s142, %s143
      %s145 = smul.addr %s144, 8
      %s146 = scalar_lea.vmem %s0, %s145
      %p147 = pneg %p48
      %p148 = pneg %p45
      %p149 = pneg %p69
      %p150 = pneg %p66
      %p151 = pneg %p97
      %p152 = pneg %p94
      %p153 = scmp.lt.s32.totalorder %s17, 1
      %s154 = scalar_select %p153, %s17, 1
      %p155 = scmp.lt.s32.totalorder %s18, 1
      %s156 = scalar_select %p155, %s18, 1
      %s157 = smul.addr %s154, 2
      %s158 = sadd.s32 %s156, %s157
      %s159 = smul.addr %s158, 8
      %s160 = scalar_lea.vmem %s2, %s159
      %p161 = scmp.lt.s32.totalorder %s17, 1
      %s162 = scalar_select %p161, %s17, 1
      %p163 = scmp.lt.s32.totalorder %s18, 1
      %s164 = scalar_select %p163, %s18, 1
      %s165 = smul.addr %s164, 2
      %s166 = smul.addr %s162, 4
      %s167 = sadd.s32 %s165, %s166
      %s168 = smul.addr %s167, 8
      %s169 = scalar_lea.vmem %s0, %s168
      %p170 = scmp.lt.s32.totalorder %s17, 1
      %s171 = scalar_select %p170, %s17, 1
      %p172 = scmp.lt.s32.totalorder %s18, 1
      %s173 = scalar_select %p172, %s18, 1
      %s174 = smul.addr %s171, 2
      %s175 = sadd.s32 %s173, %s174
      %s176 = smul.addr %s175, 8
      %s177 = scalar_lea.vmem %s2, %s176
      %v178 = vld [vmem:[%s169] sm:$0xff]
      %v179 = vld [vmem:[%s169 + $0x8] sm:$0x3]
      %v180 = vld [vmem:[%s1] sm:$0xff]
      %v181 = vld [vmem:[%s1 + $0x8] sm:$0xff]
      %v182 = vld [vmem:[%s1 + $0x10] sm:$0xff]
      %v183 = vld [vmem:[%s1 + $0x18] sm:$0xff]
      %v184 = vld [vmem:[%s1 + $0x20] sm:$0xff]
      %v185 = vld [vmem:[%s1 + $0x28] sm:$0xff]
      %v186 = vld [vmem:[%s1 + $0x30] sm:$0xff]
      %v187 = vld [vmem:[%s1 + $0x38] sm:$0xff]
      %v188 = vld [vmem:[%s1 + $0x40] sm:$0xff]
      %s189 = scalar_lea.vmem %s1, 72
      %v190 = vld [vmem:[%s189] sm:$0xff]
      %v191 = vld [vmem:[%s189 + $0x8] sm:$0xff]
      %v192 = vld [vmem:[%s189 + $0x10] sm:$0xff]
      %v193 = vld [vmem:[%s189 + $0x18] sm:$0xff]
      %v194 = vld [vmem:[%s189 + $0x20] sm:$0xff]
      %v195 = vld [vmem:[%s189 + $0x28] sm:$0xff]
      %v196 = vld [vmem:[%s189 + $0x30] sm:$0xff]
      %v197 = vld [vmem:[%s189 + $0x38] sm:$0xff]
      %v198 = vld [vmem:[%s189 + $0x40] sm:$0xff]
      %vm201 = vcmask 1046528
      %v202 = vrot.slane %v178, 1
      %v203 = vrot.slane %v179, 1
      %v204 = vsel %vm201, %v202, %v203
      %vm205 = vcmask 588800
      %v206 = vsel %vm205, %v204, 0
      %208 = vmatprep.subr.mxu0 0.0
      %209 = vmatpush1.msra.mxu0 %v190
      %210 = vmatprep.subr.mxu0 0.0
      %211 = vmatpush1.msra.mxu0 %v191
      %212 = vmatprep.subr.mxu0 0.0
      %213 = vmatpush1.msra.mxu0 %v192
      %214 = vmatprep.subr.mxu0 0.0
      %215 = vmatpush1.msra.mxu0 %v193
      %216 = vmatprep.subr.mxu0 0.0
      %217 = vmatpush1.msra.mxu0 %v194
      %218 = vmatprep.subr.mxu0 0.0
      %219 = vmatpush1.msra.mxu0 %v195
      %220 = vmatprep.subr.mxu0 0.0
      %221 = vmatpush1.msra.mxu0 %v196
      %222 = vmatprep.subr.mxu0 0.0
      %223 = vmatpush1.msra.mxu0 %v197
      %224 = vmatprep.subr.mxu0 0.0
      %225 = vmatpush1.msra.mxu0 %v198
      %226 = vmatprep.subr.mxu0 0.0
      %227 = vmatpush1.msra.mxu0 0.0
      %228 = vmatprep.subr.mxu0 0.0
      %229 = vmatpush1.msra.mxu0 0.0
      %230 = vmatprep.subr.mxu0 0.0
      %231 = vmatpush1.msra.mxu0 0.0
      %232 = vmatprep.subr.mxu0 0.0
      %233 = vmatpush1.msra.mxu0 0.0
      %234 = vmatprep.subr.mxu0 0.0
      %235 = vmatpush1.msra.mxu0 0.0
      %236 = vmatprep.subr.mxu0 0.0
      %237 = vmatpush1.msra.mxu0 0.0
      %238 = vmatprep.subr.mxu0 0.0
      %239 = vmatpush1.msra.mxu0 0.0
      %240 = vmatprep.subr.mxu0 0.0
      %241 = vmatpush1.msra.mxu0 0.0
      %242 = vmatprep.subr.mxu0 0.0
      %243 = vmatpush1.msra.mxu0 0.0
      %244 = vmatprep.subr.mxu0 0.0
      %245 = vmatpush1.msra.mxu0 0.0
      %246 = vmatprep.subr.mxu0 0.0
      %247 = vmatpush1.msra.mxu0 0.0
      %248 = vmatprep.subr.mxu0 0.0
      %249 = vmatpush1.msra.mxu0 0.0
      %250 = vmatprep.subr.mxu0 0.0
      %251 = vmatpush1.msra.mxu0 0.0
      %252 = vmatprep.subr.mxu0 0.0
      %253 = vmatpush1.msra.mxu0 0.0
      %254 = vmatprep.subr.mxu0 0.0
      %255 = vmatpush1.msra.mxu0 0.0
      %256 = vmatprep.subr.mxu0 0.0
      %257 = vmatpush1.msra.mxu0 0.0
      %258 = vmatprep.subr.mxu0 0.0
      %259 = vmatpush1.msra.mxu0 0.0
      %260 = vmatprep.subr.mxu0 0.0
      %261 = vmatpush1.msra.mxu0 0.0
      %262 = vmatprep.subr.mxu0 0.0
      %263 = vmatpush1.msra.mxu0 0.0
      %264 = vmatprep.subr.mxu0 0.0
      %265 = vmatpush1.msra.mxu0 0.0
      %266 = vmatprep.subr.mxu0 0.0
      %267 = vmatpush1.msra.mxu0 0.0
      %268 = vmatprep.subr.mxu0 0.0
      %269 = vmatpush1.msra.mxu0 0.0
      %270 = vmatprep.subr.mxu0 0.0
      %271 = vmatpush1.msra.mxu0 0.0
      %272 = vmatprep.mubr.f32.mxu0 0.0
      %273 = vmatmul.mubr.f32.gmra.mrb[0].mxu0 %v206
      %v274 = vpop.f32.mrb[0].mxu0
      %v275 = vadd.f32 0.0, %v274
      %v276 = vpop.f32.mrb[0].mxu0
      %277 = vdwg.mxu0
      %v278 = vsel %vm205, %v178, 0
      %280 = vmatprep.subr.mxu0 0.0
      %281 = vmatpush1.msra.mxu0 %v180
      %282 = vmatprep.subr.mxu0 0.0
      %283 = vmatpush1.msra.mxu0 %v181
      %284 = vmatprep.subr.mxu0 0.0
      %285 = vmatpush1.msra.mxu0 %v182
      %286 = vmatprep.subr.mxu0 0.0
      %287 = vmatpush1.msra.mxu0 %v183
      %288 = vmatprep.subr.mxu0 0.0
      %289 = vmatpush1.msra.mxu0 %v184
      %290 = vmatprep.subr.mxu0 0.0
      %291 = vmatpush1.msra.mxu0 %v185
      %292 = vmatprep.subr.mxu0 0.0
      %293 = vmatpush1.msra.mxu0 %v186
      %294 = vmatprep.subr.mxu0 0.0
      %295 = vmatpush1.msra.mxu0 %v187
      %296 = vmatprep.subr.mxu0 0.0
      %297 = vmatpush1.msra.mxu0 %v188
      %298 = vmatprep.subr.mxu0 0.0
      %299 = vmatpush1.msra.mxu0 0.0
      %300 = vmatprep.subr.mxu0 0.0
      %301 = vmatpush1.msra.mxu0 0.0
      %302 = vmatprep.subr.mxu0 0.0
      %303 = vmatpush1.msra.mxu0 0.0
      %304 = vmatprep.subr.mxu0 0.0
      %305 = vmatpush1.msra.mxu0 0.0
      %306 = vmatprep.subr.mxu0 0.0
      %307 = vmatpush1.msra.mxu0 0.0
      %308 = vmatprep.subr.mxu0 0.0
      %309 = vmatpush1.msra.mxu0 0.0
      %310 = vmatprep.subr.mxu0 0.0
      %311 = vmatpush1.msra.mxu0 0.0
      %312 = vmatprep.subr.mxu0 0.0
      %313 = vmatpush1.msra.mxu0 0.0
      %314 = vmatprep.subr.mxu0 0.0
      %315 = vmatpush1.msra.mxu0 0.0
      %316 = vmatprep.subr.mxu0 0.0
      %317 = vmatpush1.msra.mxu0 0.0
      %318 = vmatprep.subr.mxu0 0.0
      %319 = vmatpush1.msra.mxu0 0.0
      %320 = vmatprep.subr.mxu0 0.0
      %321 = vmatpush1.msra.mxu0 0.0
      %322 = vmatprep.subr.mxu0 0.0
      %323 = vmatpush1.msra.mxu0 0.0
      %324 = vmatprep.subr.mxu0 0.0
      %325 = vmatpush1.msra.mxu0 0.0
      %326 = vmatprep.subr.mxu0 0.0
      %327 = vmatpush1.msra.mxu0 0.0
      %328 = vmatprep.subr.mxu0 0.0
      %329 = vmatpush1.msra.mxu0 0.0
      %330 = vmatprep.subr.mxu0 0.0
      %331 = vmatpush1.msra.mxu0 0.0
      %332 = vmatprep.subr.mxu0 0.0
      %333 = vmatpush1.msra.mxu0 0.0
      %334 = vmatprep.subr.mxu0 0.0
      %335 = vmatpush1.msra.mxu0 0.0
      %336 = vmatprep.subr.mxu0 0.0
      %337 = vmatpush1.msra.mxu0 0.0
      %338 = vmatprep.subr.mxu0 0.0
      %339 = vmatpush1.msra.mxu0 0.0
      %340 = vmatprep.subr.mxu0 0.0
      %341 = vmatpush1.msra.mxu0 0.0
      %342 = vmatprep.subr.mxu0 0.0
      %343 = vmatpush1.msra.mxu0 0.0
      %344 = vmatprep.mubr.f32.mxu0 0.0
      %345 = vmatmul.mubr.f32.gmra.mrb[0].mxu0 %v278
      %v346 = vpop.f32.mrb[0].mxu0
      %v347 = vadd.f32 %v275, %v346
      %v348 = vpop.f32.mrb[0].mxu0
      %349 = vdwg.mxu0
      %s350 = scalar_lea.vmem %s1, 144
      %v351 = vld [vmem:[%s350] sm:$0xff]
      %v352 = vld [vmem:[%s350 + $0x8] sm:$0xff]
      %v353 = vld [vmem:[%s350 + $0x10] sm:$0xff]
      %v354 = vld [vmem:[%s350 + $0x18] sm:$0xff]
      %v355 = vld [vmem:[%s350 + $0x20] sm:$0xff]
      %v356 = vld [vmem:[%s350 + $0x28] sm:$0xff]
      %v357 = vld [vmem:[%s350 + $0x30] sm:$0xff]
      %v358 = vld [vmem:[%s350 + $0x38] sm:$0xff]
      %v359 = vld [vmem:[%s350 + $0x40] sm:$0xff]
      %vm360 = vcmask 1045504
      %v361 = vrot.slane %v178, 2
      %v362 = vrot.slane %v179, 2
      %v363 = vsel %vm360, %v361, %v362
      %v364 = vsel %vm205, %v363, 0
      %366 = vmatprep.subr.mxu0 0.0
      %367 = vmatpush1.msra.mxu0 %v351
      %368 = vmatprep.subr.mxu0 0.0
      %369 = vmatpush1.msra.mxu0 %v352
      %370 = vmatprep.subr.mxu0 0.0
      %371 = vmatpush1.msra.mxu0 %v353
      %372 = vmatprep.subr.mxu0 0.0
      %373 = vmatpush1.msra.mxu0 %v354
      %374 = vmatprep.subr.mxu0 0.0
      %375 = vmatpush1.msra.mxu0 %v355
      %376 = vmatprep.subr.mxu0 0.0
      %377 = vmatpush1.msra.mxu0 %v356
      %378 = vmatprep.subr.mxu0 0.0
      %379 = vmatpush1.msra.mxu0 %v357
      %380 = vmatprep.subr.mxu0 0.0
      %381 = vmatpush1.msra.mxu0 %v358
      %382 = vmatprep.subr.mxu0 0.0
      %383 = vmatpush1.msra.mxu0 %v359
      %384 = vmatprep.subr.mxu0 0.0
      %385 = vmatpush1.msra.mxu0 0.0
      %386 = vmatprep.subr.mxu0 0.0
      %387 = vmatpush1.msra.mxu0 0.0
      %388 = vmatprep.subr.mxu0 0.0
      %389 = vmatpush1.msra.mxu0 0.0
      %390 = vmatprep.subr.mxu0 0.0
      %391 = vmatpush1.msra.mxu0 0.0
      %392 = vmatprep.subr.mxu0 0.0
      %393 = vmatpush1.msra.mxu0 0.0
      %394 = vmatprep.subr.mxu0 0.0
      %395 = vmatpush1.msra.mxu0 0.0
      %396 = vmatprep.subr.mxu0 0.0
      %397 = vmatpush1.msra.mxu0 0.0
      %398 = vmatprep.subr.mxu0 0.0
      %399 = vmatpush1.msra.mxu0 0.0
      %400 = vmatprep.subr.mxu0 0.0
      %401 = vmatpush1.msra.mxu0 0.0
      %402 = vmatprep.subr.mxu0 0.0
      %403 = vmatpush1.msra.mxu0 0.0
      %404 = vmatprep.subr.mxu0 0.0
      %405 = vmatpush1.msra.mxu0 0.0
      %406 = vmatprep.subr.mxu0 0.0
      %407 = vmatpush1.msra.mxu0 0.0
      %408 = vmatprep.subr.mxu0 0.0
      %409 = vmatpush1.msra.mxu0 0.0
      %410 = vmatprep.subr.mxu0 0.0
      %411 = vmatpush1.msra.mxu0 0.0
      %412 = vmatprep.subr.mxu0 0.0
      %413 = vmatpush1.msra.mxu0 0.0
      %414 = vmatprep.subr.mxu0 0.0
      %415 = vmatpush1.msra.mxu0 0.0
      %416 = vmatprep.subr.mxu0 0.0
      %417 = vmatpush1.msra.mxu0 0.0
      %418 = vmatprep.subr.mxu0 0.0
      %419 = vmatpush1.msra.mxu0 0.0
      %420 = vmatprep.subr.mxu0 0.0
      %421 = vmatpush1.msra.mxu0 0.0
      %422 = vmatprep.subr.mxu0 0.0
      %423 = vmatpush1.msra.mxu0 0.0
      %424 = vmatprep.subr.mxu0 0.0
      %425 = vmatpush1.msra.mxu0 0.0
      %426 = vmatprep.subr.mxu0 0.0
      %427 = vmatpush1.msra.mxu0 0.0
      %428 = vmatprep.subr.mxu0 0.0
      %429 = vmatpush1.msra.mxu0 0.0
      %430 = vmatprep.mubr.f32.mxu0 0.0
      %431 = vmatmul.mubr.f32.gmra.mrb[0].mxu0 %v364
      %v432 = vpop.f32.mrb[0].mxu0
      %v433 = vadd.f32 0.0, %v432
      %v434 = vpop.f32.mrb[0].mxu0
      %435 = vdwg.mxu0
      %v436 = vadd.f32 %v347, %v433
      %437 = vst [vmem:[%s177] sm:$0xff] %v436
      %p438 = scmp.lt.s32.totalorder %s17, 1
      %s439 = scalar_select %p438, %s17, 1
      %p440 = scmp.lt.s32.totalorder %s18, 1
      %s441 = scalar_select %p440, %s18, 1
      %s442 = smul.addr %s439, 2
      %s443 = sadd.s32 %s441, %s442
      %s444 = smul.addr %s443, 8
      %s445 = scalar_lea.vmem %s2, %s444
      // Predicated region
      $region29: #{separable_conv2d.1} parent=27 // pred_check
        %p446 = pneg %p94
      $region30: #{separable_conv2d.1} parent=27 // pred_check_branch
        %448 = sbr.rel (%p446) target = $region32
      $region31: #{separable_conv2d.1} parent=27 // pred_region
        _
      $region32: #{separable_conv2d.1} parent=27 // pred_fallthru
        _
    $region28: #{separable_conv2d.1} parent=5 // pred_fallthru
      _
    %p449 = scmp.le.s32.totalorder 2, %s8
    // Predicated region
    $region33: #{separable_conv2d.1} parent=5 // pred_check
      %p450 = pneg %p449
    $region34: #{separable_conv2d.1} parent=5 // pred_check_branch
      %452 = sbr.rel (%p450) target = $region36
    $region35: #{separable_conv2d.1} parent=5 // pred_region
      %s453 = ssub.s32 %s8, 2
      // Predicated region
      $region37: #{separable_conv2d.1} parent=35 // pred_check
        %p454 = pneg %p100
      $region38: #{separable_conv2d.1} parent=35 // pred_check_branch
        %456 = sbr.rel (%p454) target = $region40
      $region39: #{separable_conv2d.1} parent=35 // pred_region
        %p457 = scmp.lt.s32.totalorder %s19, 1
        %s458 = scalar_select %p457, %s19, 1
        %p459 = scmp.lt.s32.totalorder %s20, 1
        %s460 = scalar_select %p459, %s20, 1
        %s461 = smul.addr %s458, 2
        %s462 = sadd.s32 %s460, %s461
        %s463 = smul.addr %s462, 8
        %s464 = scalar_lea.vmem %s2, %s463
      $region40: #{separable_conv2d.1} parent=35 // pred_fallthru
        _
    $region36: #{separable_conv2d.1} parent=5 // pred_fallthru
      _
  $region6: #{separable_conv2d.1} parent=0 // loop_footer
    %s12 = sadd.s32 1, %s8
  $region7: #{separable_conv2d.1} parent=0 // loop_footer_branch
    %7 = sbr.rel target = $region3
  $region8: #{separable_conv2d.1} parent=0 // loop_exit
    _

</llo_original>
